<compile_context>
chip_gen: v5e
topology: v5e:2x2
jax: 0.10.0
libtpu: 0.0.40
codegen_flags: <defaults>
</compile_context>

<pallas_src>
import functools
import operator

import jax
import jax.numpy as jnp
import numpy as np
from jax.experimental import pallas as pl
from jax.experimental.pallas import tpu as pltpu

_TARGET_BLOCK_BYTES = 2 * 1024 * 1024   # ~2 MiB of x per grid step
_MIN_GRID_STEPS = 8                     # keep the parallel axis shardable (v7x megacore)


def _round_up(n, m):
    return (n + m - 1) // m * m


def _make_kernel(*, C, L, W, TR, idxs, per_row_mask):
    """Build the kernel body; all channel-selection logic is static."""

    def kernel(sel_ref, src_ref, x_ref, o_ref):
        i = pl.program_id(0)

        @pl.when(sel_ref[i] != 0)
        def _copy_selected_tile():
            if per_row_mask:
                # (B*C, L) view: row r belongs to channel r % C.
                rows = i * TR + jax.lax.broadcasted_iota(jnp.int32, (TR, 1), 0)
                chan = rows % C
            else:
                # (B, C*L) view: lane l belongs to channel (l // L) % C,
                # independent of the row.
                lanes = jax.lax.broadcasted_iota(jnp.int32, (1, W), 1)
                chan = (lanes // L) % C
            keep = functools.reduce(operator.or_, [chan == j for j in idxs])
            x = x_ref[...]
            # Exact PyTorch semantics: dropped channels are exactly zero even
            # if x holds NaN/Inf there, so select rather than multiply.
            o_ref[...] = jnp.where(keep, x, jnp.zeros_like(x))

        @pl.when(sel_ref[i] == 0)
        def _zero_unselected_tile():
            # Never touches x_ref -> no HBM read consumed for this tile.
            o_ref[...] = jnp.zeros_like(o_ref)

    return kernel


@functools.partial(jax.jit, static_argnames=("idxs",))
def index_sampler(x, idxs):
    """JAX/Pallas equivalent of IndexSampler(input_size, idxs).forward(x)."""
    if x.ndim < 2:
        raise ValueError("IndexSampler expects at least (batch, channel, ...) input")
    B, C = int(x.shape[0]), int(x.shape[1])
    L = 1
    for d in x.shape[2:]:
        L *= int(d)

    idxs = tuple(sorted({int(j) % C for j in idxs}))
    if not idxs:
        return jnp.zeros_like(x)

    # ---- choose a lane-dense 2D view --------------------------------------
    per_row_mask = (L % 128 == 0)
    if per_row_mask:
        R, W = B * C, L            # channel boundaries == row boundaries
    else:
        R, W = B, C * L            # keep the last dim as wide as possible
        # TODO(synk): lane-tile this fallback view when a single 8-row block
        # exceeds the VMEM budget (very wide C*H*W with H*W % 128 != 0).
    x2 = x.reshape(R, W)

    # ---- row tile: multiple of 8 sublanes, ~_TARGET_BLOCK_BYTES per block --
    itemsize = jnp.dtype(x.dtype).itemsize
    row_bytes = W * itemsize
    if R <= 8:
        TR = R                                   # tiny: full sublane extent
    else:
        tr_bw = max(8, (_TARGET_BLOCK_BYTES // row_bytes) // 8 * 8)
        tr_grid = max(8, _round_up(pl.cdiv(R, _MIN_GRID_STEPS), 8))
        TR = min(tr_bw, tr_grid, _round_up(R, 8))
    grid_rows = pl.cdiv(R, TR)
    block_bytes = TR * W * itemsize

    # ---- static read-skip tables (scalar-prefetched into SMEM) -------------
    idx_set = set(idxs)
    has_sel = np.ones((grid_rows,), dtype=np.int32)
    if per_row_mask:
        for i in range(grid_rows):
            r0, r1 = i * TR, min((i + 1) * TR, R)
            if r1 - r0 >= C:
                continue                          # tile spans every channel
            chans = {r % C for r in range(r0, r1)}
            has_sel[i] = 1 if (chans & idx_set) else 0
    src = np.zeros((grid_rows,), dtype=np.int32)
    last = int(np.argmax(has_sel))                # first selected tile
    for i in range(grid_rows):
        if has_sel[i]:
            last = i
        src[i] = last                             # pin skipped tiles to an
                                                  # already-fetched block index

    kernel = _make_kernel(C=C, L=L, W=W, TR=TR, idxs=idxs,
                          per_row_mask=per_row_mask)

    grid_spec = pltpu.PrefetchScalarGridSpec(
        num_scalar_prefetch=2,
        grid=(grid_rows,),
        in_specs=[pl.BlockSpec((TR, W), lambda i, sel, src: (src[i], 0))],
        out_specs=pl.BlockSpec((TR, W), lambda i, sel, src: (i, 0)),
    )

    # Double-buffered in + out ~= 4x block; keep an explicit, conservative
    # scoped-VMEM budget that fits every generation (v5e 16 MiB default,
    # v7x 64 MiB physical per TensorCore).
    vmem_limit = int(min(48 * 1024 * 1024,
                         max(16 * 1024 * 1024, 6 * block_bytes)))

    out2 = pl.pallas_call(
        kernel,
        out_shape=jax.ShapeDtypeStruct((R, W), x.dtype),
        grid_spec=grid_spec,
        compiler_params=pltpu.CompilerParams(
            dimension_semantics=("parallel",),
            vmem_limit_bytes=vmem_limit,
        ),
    )(jnp.asarray(has_sel), jnp.asarray(src), x2)

    return out2.reshape(x.shape)


if __name__ == "__main__":
    # Small deterministic example consistent with an NCHW conv-style input.
    B, C, H, W = 2, 4, 16, 16
    idxs = (0, 2)  # channels to keep (the module's `idxs`)

    key = jax.random.PRNGKey(0)
    x = jax.random.normal(key, (B, C, H, W), dtype=jnp.float32)

    out = index_sampler(x, idxs)
    out = jax.block_until_ready(out)

    # Pure-JAX reference of the PyTorch forward.
    ref = jnp.zeros_like(x)
    for i in idxs:
        ref = ref.at[:, i].set(x[:, i])

    assert out.shape == x.shape and out.dtype == x.dtype
    assert jnp.array_equal(out, ref), "mismatch vs reference"
    print("KERNEL_OK")
</pallas_src>

<mosaic_0001>
module attributes {stable_mosaic.version = 11 : i64} {
  func.func @kernel(%arg0: i32, %arg1: memref<1xi32, #tpu.memory_space<smem>>, %arg2: memref<1xi32, #tpu.memory_space<smem>>, %arg3: memref<8x256xf32, #tpu.memory_space<vmem>>, %arg4: memref<8x256xf32, #tpu.memory_space<vmem>>) attributes {dimension_semantics = [#tpu.dimension_semantics<parallel>], iteration_bounds = array<i64: 1>, scalar_prefetch = 2 : i64, scratch_operands = 0 : i64, tpu.core_type = #tpu.core_type<tc>, window_params = [{transform_indices = @transform_0, window_bounds = array<i64: 8, 256>}, {transform_indices = @transform_1, window_bounds = array<i64: 8, 256>}]} {
    %0 = arith.index_cast %arg0 : i32 to index
    %1 = memref.load %arg1[%0] : memref<1xi32, #tpu.memory_space<smem>>
    %c0_i32 = arith.constant 0 : i32
    %2 = arith.cmpi ne, %1, %c0_i32 : i32
    %3 = arith.extui %2 : i1 to i32
    %c0_i32_0 = arith.constant 0 : i32
    %4 = arith.cmpi ne, %3, %c0_i32_0 : i32
    scf.if %4 {
      %c8_i32 = arith.constant 8 : i32
      %10 = arith.muli %arg0, %c8_i32 : i32
      %11 = tpu.iota {dimensions = array<i32: 0>} : vector<8x1xi32>
      %12 = vector.broadcast %10 : i32 to vector<8x1xi32>
      %13 = arith.addi %12, %11 : vector<8x1xi32>
      %c4_i32 = arith.constant 4 : i32
      %c0_i32_3 = arith.constant 0 : i32
      %14 = arith.cmpi eq, %c4_i32, %c0_i32_3 : i32
      %c1_i32 = arith.constant 1 : i32
      %15 = arith.select %14, %c1_i32, %c4_i32 : i32
      %16 = vector.broadcast %15 : i32 to vector<8x1xi32>
      %17 = arith.remsi %13, %16 : vector<8x1xi32>
      %c0_i32_4 = arith.constant 0 : i32
      %18 = vector.broadcast %c0_i32_4 : i32 to vector<8x1xi32>
      %19 = arith.cmpi ne, %17, %18 : vector<8x1xi32>
      %c0_i32_5 = arith.constant 0 : i32
      %20 = vector.broadcast %c0_i32_5 : i32 to vector<8x1xi32>
      %21 = arith.cmpi slt, %17, %20 : vector<8x1xi32>
      %c0_i32_6 = arith.constant 0 : i32
      %22 = arith.cmpi slt, %15, %c0_i32_6 : i32
      %23 = vector.broadcast %22 : i1 to vector<8x1xi1>
      %24 = vector.broadcast %23 : vector<8x1xi1> to vector<8x1xi1>
      %25 = arith.xori %21, %24 : vector<8x1xi1>
      %26 = arith.andi %25, %19 : vector<8x1xi1>
      %27 = vector.broadcast %15 : i32 to vector<8x1xi32>
      %28 = arith.addi %17, %27 : vector<8x1xi32>
      %29 = arith.select %26, %28, %17 : vector<8x1xi1>, vector<8x1xi32>
      %c0_i32_7 = arith.constant 0 : i32
      %30 = vector.broadcast %c0_i32_7 : i32 to vector<8x1xi32>
      %31 = arith.cmpi eq, %29, %30 : vector<8x1xi32>
      %c2_i32 = arith.constant 2 : i32
      %32 = vector.broadcast %c2_i32 : i32 to vector<8x1xi32>
      %33 = arith.cmpi eq, %29, %32 : vector<8x1xi32>
      %34 = arith.ori %31, %33 : vector<8x1xi1>
      %c0 = arith.constant 0 : index
      %c0_8 = arith.constant 0 : index
      %35 = vector.load %arg3[%c0, %c0_8] : memref<8x256xf32, #tpu.memory_space<vmem>>, vector<8x256xf32>
      %cst = arith.constant 0.000000e+00 : f32
      %36 = vector.broadcast %cst : f32 to vector<8x256xf32>
      %37 = vector.shape_cast %34 : vector<8x1xi1> to vector<8x1xi1>
      %38 = vector.broadcast %37 : vector<8x1xi1> to vector<8x256xi1>
      %39 = arith.select %38, %35, %36 : vector<8x256xi1>, vector<8x256xf32>
      %c0_9 = arith.constant 0 : index
      %c0_10 = arith.constant 0 : index
      %40 = vector.load %arg4[%c0_9, %c0_10] : memref<8x256xf32, #tpu.memory_space<vmem>>, vector<8x256xf32>
      tpu.vector_store %arg4[%c0_9, %c0_10], %39 {strides = array<i32>} : memref<8x256xf32, #tpu.memory_space<vmem>>, vector<8x256xf32>,
    } else {
    }
    %5 = arith.index_cast %arg0 : i32 to index
    %6 = memref.load %arg1[%5] : memref<1xi32, #tpu.memory_space<smem>>
    %c0_i32_1 = arith.constant 0 : i32
    %7 = arith.cmpi eq, %6, %c0_i32_1 : i32
    %8 = arith.extui %7 : i1 to i32
    %c0_i32_2 = arith.constant 0 : i32
    %9 = arith.cmpi ne, %8, %c0_i32_2 : i32
    scf.if %9 {
      %cst = arith.constant 0.000000e+00 : f32
      %10 = vector.broadcast %cst : f32 to vector<8x256xf32>
      %c0 = arith.constant 0 : index
      %c0_3 = arith.constant 0 : index
      %11 = vector.load %arg4[%c0, %c0_3] : memref<8x256xf32, #tpu.memory_space<vmem>>, vector<8x256xf32>
      tpu.vector_store %arg4[%c0, %c0_3], %10 {strides = array<i32>} : memref<8x256xf32, #tpu.memory_space<vmem>>, vector<8x256xf32>,
    } else {
    }
    return
  }
  func.func @transform_0(%arg0: i32, %arg1: memref<1xi32, #tpu.memory_space<smem>>, %arg2: memref<1xi32, #tpu.memory_space<smem>>) -> (i32, i32) {
    %0 = arith.index_cast %arg0 : i32 to index
    %1 = memref.load %arg2[%0] : memref<1xi32, #tpu.memory_space<smem>>
    %c0_i32 = arith.constant 0 : i32
    %c0_i32_0 = arith.constant 0 : i32
    return %1, %c0_i32 : i32, i32
  }
  func.func @transform_1(%arg0: i32, %arg1: memref<1xi32, #tpu.memory_space<smem>>, %arg2: memref<1xi32, #tpu.memory_space<smem>>) -> (i32, i32) {
    %c0_i32 = arith.constant 0 : i32
    %c0_i32_0 = arith.constant 0 : i32
    return %arg0, %c0_i32 : i32, i32
  }
}

</mosaic_0001>

<llo_original>
// kernel: index_sampler.1
$region0: #{index_sampler.1}
  #allocation0 [shape = 'u32[]', space=smem, size = 0x4, offset = 0x4, fixed_abs, tag = 'smem constant byte address 0x4 - core index']
  #allocation1 [shape = 'u32[72,128]{1,0:T(1,128)}', space=vmem, size = 0x9000, scoped, tag = 'internal scratch']
  #allocation2 [shape = 's32[1]{0}', space=sflag, size = 0x4, scoped, tag = 'scoped memory for index_sampler.1']
  #allocation3 [shape = 's32[1]{0:T(128)S(6)}', space=smem, size = 0x200, scoped, tag = 'prefetched SMEM operand 0']
  #allocation4 [shape = 's32[1]{0:T(128)S(6)}', space=smem, size = 0x200, scoped, tag = 'prefetched SMEM operand 1']
  %s0 = inlined_call_operand.<no memory space> [shape: s32[1], index: 0, kind: input, shape index: {}]
  %s1 = inlined_call_operand.<no memory space> [shape: s32[1], index: 1, kind: input, shape index: {}]
  %s2 = inlined_call_operand.vmem [shape: f32[8,256], index: 2, kind: input, shape index: {}]
  %s3 = inlined_call_operand.vmem [shape: f32[8,256], index: 3, kind: output, shape index: {}]
  %s4 = sld [smem:[#allocation0]]
  $region22: #{index_sampler.1} parent=0
    _
  %s6 = ssub.s32 1, %s4
  %s7 = scalar_select 0, %s6, %s4
  %8 = sst [smem:[#allocation3]] %s0
  %9 = sst [smem:[#allocation4]] %s1
  // Predicated region
  $region2: #{index_sampler.1} parent=0 // pred_check
    _
  $region3: #{index_sampler.1} parent=0 // pred_check_branch
    %11 = sbr.rel (0) target = $region5
  $region4: #{index_sampler.1} parent=0 // pred_region
    %s12 = sld [smem:[#allocation4]]
    %p13 = scmp.lt.s32.totalorder %s12, 0
    %s14 = scalar_select %p13, %s12, 0
    %s15 = smul.addr %s14, 2
    %s16 = smul.addr %s15, 8
    %s17 = scalar_lea.vmem %s2, %s16
    %s18 = sld [smem:[#allocation4]]
  $region5: #{index_sampler.1} parent=0 // pred_fallthru
    _
  %s19 = sld [smem:[#allocation4]]
  %p20 = scmp.lt.s32.totalorder %s19, 0
  %s21 = scalar_select %p20, %s19, 0
  %s22 = smul.addr %s21, 2
  %s23 = smul.addr %s22, 8
  %s24 = scalar_lea.vmem %s2, %s23
  %s25 = sld [smem:[#allocation4]]
  %p26 = scmp.lt.s32.totalorder %s25, 0
  %s27 = scalar_select %p26, %s25, 0
  %s28 = smul.addr %s27, 2
  %s29 = smul.addr %s28, 8
  %s30 = scalar_lea.vmem %s2, %s29
  %s31 = sld [smem:[#allocation4]]
  %s32 = sld [smem:[#allocation3]]
  %p33 = scmp.ne.s32.totalorder %s32, 0
  // Predicated region
  $region6: #{index_sampler.1} parent=0 // pred_check
    %p34 = pneg %p33
  $region7: #{index_sampler.1} parent=0 // pred_check_branch
    %36 = sbr.rel (%p34) target = $region9
  $region8: #{index_sampler.1} parent=0 // pred_region
    %s37 = smul.u32 0, 8
    %v38 = vlaneseq
    %v39 = vshrl.u32 %v38, 7
    %v40 = vstv %s37
    %v41 = vadd.s32 %v40, %v39
    %vm42 = vcmp.lt.s32.totalorder %v41, 0
    %v43 = vsub.s32 0, %v41
    %v44 = vsel %vm42, %v43, %v41
    %v45 = vshrl.u32 %v44, 2
    %v46 = vand.u32 %v44, 3
    %v47 = vsub.s32 0, %v46
    %v48 = vsel %vm42, %v47, %v46
    %vm49 = vcmp.ne.s32.totalorder %v48, 0
    %vm50 = vcmp.lt.s32.totalorder %v48, 0
    %vm51 = vmand %vm50, %vm49
    %v52 = vadd.s32 %v48, 4
    %v53 = vsel %vm51, %v52, %v48
    %vm54 = vcmp.eq.s32.totalorder %v53, 0
    %vm55 = vcmp.eq.s32.totalorder %v53, 2
    %vm56 = vmor %vm54, %vm55
    %v57 = vld [vmem:[%s30] sm:$0xff]
    %v58 = vld [vmem:[%s30 + $0x8] sm:$0xff]
    %v59 = vsel %vm56, 1, 0
    %vm60 = vcmp.eq.s32.totalorder %v59, 1
    %v61 = vsel %vm60, %v57, 0.0
    %v62 = vsel %vm60, %v58, 0.0
    %63 = vst [vmem:[%s3] sm:$0xff] %v61
    %64 = vst [vmem:[%s3 + $0x8] sm:$0xff] %v62
  $region9: #{index_sampler.1} parent=0 // pred_fallthru
    _
  %s65 = sld [smem:[#allocation3]]
  %p66 = scmp.eq.s32.totalorder %s65, 0
  // Predicated region
  $region10: #{index_sampler.1} parent=0 // pred_check
    %p67 = pneg %p66
  $region11: #{index_sampler.1} parent=0 // pred_check_branch
    %69 = sbr.rel (%p67) target = $region13
  $region12: #{index_sampler.1} parent=0 // pred_region
    %70 = vst [vmem:[%s3] sm:$0xff] 0.0
    %71 = vst [vmem:[%s3 + $0x8] sm:$0xff] 0.0
  $region13: #{index_sampler.1} parent=0 // pred_fallthru
    _
  // Predicated region
  $region14: #{index_sampler.1} parent=0 // pred_check
    _
  $region15: #{index_sampler.1} parent=0 // pred_check_branch
    %73 = sbr.rel (0) target = $region17
  $region16: #{index_sampler.1} parent=0 // pred_region
    _
  $region17: #{index_sampler.1} parent=0 // pred_fallthru
    _
  // Predicated region
  $region18: #{index_sampler.1} parent=0 // pred_check
    _
  $region19: #{index_sampler.1} parent=0 // pred_check_branch
    %75 = sbr.rel (0) target = $region21
  $region20: #{index_sampler.1} parent=0 // pred_region
    _
  $region21: #{index_sampler.1} parent=0 // pred_fallthru
    _

</llo_original>
